<compile_context>
chip_gen: v7x
topology: tpu7x:2x2x1
jax: 0.10.0
libtpu: 0.0.40
codegen_flags: <defaults>
</compile_context>

<pallas_src>
import jax
import jax.numpy as jnp
from jax.experimental import pallas as pl
from jax.experimental.pallas import tpu as pltpu

LANE = 128      # pad feature / hidden / class dims to the 128-lane width
SUBLANE = 16    # pad node count to bf16 sublane packing


def _round_up(x, m):
    return (x + m - 1) // m * m


# ------------------------------- fused kernel ------------------------------ #

def fused_gin_kernel(x_ref, adj_ref, eps_ref, w1_ref, b1_ref, w2_ref, b2_ref,
                     lw_ref, lb_ref, out_ref, h_scr, rep_scr):
    """Grid axis 0 = GIN layer index.  h / node_rep stay resident in VMEM
    scratch across layers; classifier is applied on the last step only."""
    l = pl.program_id(0)

    @pl.when(l == 0)
    def _init():
        h_scr[...] = x_ref[...]
        rep_scr[...] = jnp.zeros_like(rep_scr)

    h = h_scr[...]                                            # f32 [Np, D]

    # aggregation: sum_j relu(h_j) over in-neighbors  ==  A @ relu(H)
    agg = jnp.dot(adj_ref[...], jnp.maximum(h, 0.0).astype(jnp.bfloat16),
                  preferred_element_type=jnp.float32)

    # (1 + eps) * h + agg        (eps pre-broadcast on host)
    z = eps_ref[0] * h + agg

    # mlp Linear1 (+ folded BN1) -> ReLU
    t = jnp.dot(z.astype(jnp.bfloat16), w1_ref[0],
                preferred_element_type=jnp.float32) + b1_ref[0]
    t = jnp.maximum(t, 0.0)

    # mlp Linear2 (+ folded outer BN) -> ReLU
    # (eval-mode dropout == identity; relu(relu(x)) == relu(x) so this value is
    #  both the next-layer input and the node_representation term)
    y = jnp.dot(t.astype(jnp.bfloat16), w2_ref[0],
                preferred_element_type=jnp.float32) + b2_ref[0]
    h_new = jnp.maximum(y, 0.0)

    h_scr[...] = h_new
    rep_scr[...] = rep_scr[...] + h_new                       # node_rep += relu(h_l)

    @pl.when(l == pl.num_programs(0) - 1)
    def _final():
        out_ref[...] = (jnp.dot(rep_scr[...].astype(jnp.bfloat16), lw_ref[...],
                                preferred_element_type=jnp.float32)
                        + lb_ref[...])


# --------------------------------- wrapper --------------------------------- #

def fused_forward(x, adj, packed, num_classes):
    """Full Model.forward (eval mode) in a single fused Pallas kernel."""
    n, f = x.shape
    L, _, D = packed["w1"].shape
    C = packed["lin_w"].shape[1]
    n_pad = _round_up(n, SUBLANE)

    x_p = jnp.zeros((n_pad, D), jnp.float32).at[:n, :f].set(x)
    adj_p = (jnp.zeros((n_pad, n_pad), jnp.float32).at[:n, :n].set(adj)
             .astype(jnp.bfloat16))                 # small int counts: exact in bf16

    out = pl.pallas_call(
        fused_gin_kernel,
        out_shape=jax.ShapeDtypeStruct((n_pad, C), jnp.float32),
        grid_spec=pltpu.PrefetchScalarGridSpec(
            num_scalar_prefetch=0,
            grid=(L,),
            in_specs=[
                pl.BlockSpec((n_pad, D), lambda l: (0, 0)),       # x (layer-0 input)
                pl.BlockSpec((n_pad, n_pad), lambda l: (0, 0)),   # adjacency
                pl.BlockSpec((1, 1, D), lambda l: (l, 0, 0)),     # (1 + eps) row
                pl.BlockSpec((1, D, D), lambda l: (l, 0, 0)),     # W1 (BN1-folded)
                pl.BlockSpec((1, 1, D), lambda l: (l, 0, 0)),     # b1
                pl.BlockSpec((1, D, D), lambda l: (l, 0, 0)),     # W2 (BN2-folded)
                pl.BlockSpec((1, 1, D), lambda l: (l, 0, 0)),     # b2
                pl.BlockSpec((D, C), lambda l: (0, 0)),           # classifier W
                pl.BlockSpec((1, C), lambda l: (0, 0)),           # classifier b
            ],
            out_specs=pl.BlockSpec((n_pad, C), lambda l: (0, 0)),
            scratch_shapes=[pltpu.VMEM((n_pad, D), jnp.float32),  # h
                            pltpu.VMEM((n_pad, D), jnp.float32)], # node_rep
        ),
        compiler_params=pltpu.CompilerParams(
            dimension_semantics=("arbitrary",)),   # layers carry state -> sequential
    )(x_p, adj_p, packed["eps_row"], packed["w1"], packed["b1"],
      packed["w2"], packed["b2"], packed["lin_w"], packed["lin_b"])

    return out[:n, :num_classes]


# ------------------------- host-side parameter packing --------------------- #

def fold_bn(gamma, beta, mean, var, eps=1e-5):
    scale = gamma / jnp.sqrt(var + eps)
    shift = beta - mean * scale
    return scale, shift


def pack_params(params, num_features, nhid, num_classes):
    """Fold BN affines into the Linear weights, zero-pad feature dims to the
    lane width, cast matmul operands to bf16 and stack per-layer arrays."""
    D = _round_up(max(num_features, nhid), LANE)
    C = _round_up(num_classes, LANE)
    w1s, b1s, w2s, b2s, eps_rows = [], [], [], [], []
    for lp in params["layers"]:
        s1, t1 = fold_bn(lp["bn1_g"], lp["bn1_b"], lp["bn1_m"], lp["bn1_v"])
        s2, t2 = fold_bn(lp["bn2_g"], lp["bn2_b"], lp["bn2_m"], lp["bn2_v"])
        w1f = lp["w1"] * s1[None, :]          # fold mlp-internal BN into Linear1
        b1f = lp["b1"] * s1 + t1
        w2f = lp["w2"] * s2[None, :]          # fold outer per-layer BN into Linear2
        b2f = lp["b2"] * s2 + t2
        in_dim, emb = lp["w1"].shape
        w1s.append(jnp.zeros((D, D), jnp.float32).at[:in_dim, :emb].set(w1f))
        b1s.append(jnp.zeros((1, D), jnp.float32).at[0, :emb].set(b1f))
        w2s.append(jnp.zeros((D, D), jnp.float32).at[:emb, :emb].set(w2f))
        b2s.append(jnp.zeros((1, D), jnp.float32).at[0, :emb].set(b2f))
        eps_rows.append(jnp.full((1, D), 1.0 + lp["eps"], jnp.float32))
    lin_w = jnp.zeros((D, C), jnp.float32).at[:nhid, :num_classes].set(params["lin_w"])
    lin_b = jnp.zeros((1, C), jnp.float32).at[0, :num_classes].set(params["lin_b"])
    return dict(
        w1=jnp.stack(w1s).astype(jnp.bfloat16),
        b1=jnp.stack(b1s),
        w2=jnp.stack(w2s).astype(jnp.bfloat16),
        b2=jnp.stack(b2s),
        eps_row=jnp.stack(eps_rows),
        lin_w=lin_w.astype(jnp.bfloat16),
        lin_b=lin_b,
    )


# ------------------------------- references -------------------------------- #

def packed_forward_ref(x, adj, packed, num_classes):
    """Pure-jnp mirror of the fused kernel (same padding / folds / bf16 casts)."""
    n, f = x.shape
    L, _, D = packed["w1"].shape
    n_pad = _round_up(n, SUBLANE)
    h = jnp.zeros((n_pad, D), jnp.float32).at[:n, :f].set(x)
    adj_p = (jnp.zeros((n_pad, n_pad), jnp.float32).at[:n, :n].set(adj)
             .astype(jnp.bfloat16))
    rep = jnp.zeros_like(h)
    for l in range(L):
        agg = jnp.dot(adj_p, jnp.maximum(h, 0.0).astype(jnp.bfloat16),
                      preferred_element_type=jnp.float32)
        z = packed["eps_row"][l] * h + agg
        t = jnp.dot(z.astype(jnp.bfloat16), packed["w1"][l],
                    preferred_element_type=jnp.float32) + packed["b1"][l]
        t = jnp.maximum(t, 0.0)
        y = jnp.dot(t.astype(jnp.bfloat16), packed["w2"][l],
                    preferred_element_type=jnp.float32) + packed["b2"][l]
        h = jnp.maximum(y, 0.0)
        rep = rep + h
    out = jnp.dot(rep.astype(jnp.bfloat16), packed["lin_w"],
                  preferred_element_type=jnp.float32) + packed["lin_b"]
    return out[:n, :num_classes]


def model_forward_ref(x, adj, params):
    """Original-model math (eval mode), full f32, unfolded BN."""
    def bn(v, g, b, m, var):
        return (v - m) / jnp.sqrt(var + 1e-5) * g + b
    h = x
    rep = 0.0
    for lp in params["layers"]:
        agg = adj @ jnp.maximum(h, 0.0)                       # aggr='add' of relu(x_j)
        z = (1.0 + lp["eps"]) * h + agg
        t = z @ lp["w1"] + lp["b1"]
        t = jnp.maximum(bn(t, lp["bn1_g"], lp["bn1_b"], lp["bn1_m"], lp["bn1_v"]), 0.0)
        y = t @ lp["w2"] + lp["b2"]
        h = jnp.maximum(bn(y, lp["bn2_g"], lp["bn2_b"], lp["bn2_m"], lp["bn2_v"]), 0.0)
        rep = rep + h
    return rep @ params["lin_w"] + params["lin_b"]


# -------------------------------- param init -------------------------------- #

def init_params(key, num_features, nhid, num_classes, num_layers):
    dims = [num_features] + [nhid] * num_layers
    layers = []
    for layer in range(num_layers):
        in_dim, emb = dims[layer], nhid
        key, *ks = jax.random.split(key, 11)
        layers.append(dict(
            eps=jnp.float32(0.0),                                    # GINConv eps init
            w1=jax.random.normal(ks[0], (in_dim, emb), jnp.float32) * 0.2,
            b1=jax.random.normal(ks[1], (emb,), jnp.float32) * 0.1,
            w2=jax.random.normal(ks[2], (emb, emb), jnp.float32) * 0.2,
            b2=jax.random.normal(ks[3], (emb,), jnp.float32) * 0.1,
            # BatchNorm1d (eval mode): learnable gamma/beta + running stats
            bn1_g=1.0 + 0.1 * jax.random.normal(ks[4], (emb,), jnp.float32),
            bn1_b=0.1 * jax.random.normal(ks[5], (emb,), jnp.float32),
            bn1_m=0.05 * jax.random.normal(ks[6], (emb,), jnp.float32),
            bn1_v=1.0 + 0.1 * jnp.abs(jax.random.normal(ks[7], (emb,), jnp.float32)),
            bn2_g=1.0 + 0.1 * jax.random.normal(ks[8], (emb,), jnp.float32),
            bn2_b=0.1 * jax.random.normal(ks[9], (emb,), jnp.float32),
            bn2_m=jnp.zeros((emb,), jnp.float32),
            bn2_v=jnp.ones((emb,), jnp.float32),
        ))
    key, ka, kb = jax.random.split(key, 3)
    lin_w = jax.random.normal(ka, (nhid, num_classes), jnp.float32) * 0.2
    lin_b = 0.1 * jax.random.normal(kb, (num_classes,), jnp.float32)
    return dict(layers=layers, lin_w=lin_w, lin_b=lin_b)


# ----------------------------------- main ----------------------------------- #

if __name__ == "__main__":
    # small synthetic graph: N nodes, E directed edges
    N, E = 16, 40
    NUM_FEATURES, NHID, NUM_CLASSES, NUM_LAYERS = 16, 32, 8, 3

    key = jax.random.PRNGKey(0)
    key, kx, ke = jax.random.split(key, 3)
    x = jax.random.normal(kx, (N, NUM_FEATURES), jnp.float32)
    edge_index = jax.random.randint(ke, (2, E), 0, N)   # row0 = src(j), row1 = dst(i)

    # dense adjacency: A[dst, src] = multiplicity of edge src -> dst
    src, dst = edge_index[0], edge_index[1]
    adj = jnp.zeros((N, N), jnp.float32).at[dst, src].add(1.0)

    params = init_params(key, NUM_FEATURES, NHID, NUM_CLASSES, NUM_LAYERS)
    packed = pack_params(params, NUM_FEATURES, NHID, NUM_CLASSES)

    out = fused_forward(x, adj, packed, NUM_CLASSES)
    out = jax.block_until_ready(out)
    assert out.shape == (N, NUM_CLASSES)

    # exact-semantics check: jnp mirror of the kernel math (same bf16 casts/folds)
    ref_packed = packed_forward_ref(x, adj, packed, NUM_CLASSES)
    assert jnp.allclose(out, ref_packed, atol=1e-2, rtol=1e-2), "mismatch vs packed ref"

    # sanity check vs the full-precision original-model math (loose: bf16 operands)
    ref_f32 = model_forward_ref(x, adj, params)
    assert jnp.allclose(out, ref_f32, atol=0.6, rtol=0.2), "mismatch vs f32 reference"

    # TODO(synk): F.dropout is stochastic in training mode; implemented as the
    # eval-mode identity (consistent with folded BatchNorm running statistics).
    print("KERNEL_OK")
</pallas_src>

<mosaic_0001>
module attributes {stable_mosaic.version = 11 : i64} {
  func.func @fused_gin_kernel(%arg0: i32, %arg1: memref<16x128xf32, #tpu.memory_space<vmem>>, %arg2: memref<16x16xbf16, #tpu.memory_space<vmem>>, %arg3: memref<1x1x128xf32, #tpu.memory_space<vmem>>, %arg4: memref<1x128x128xbf16, #tpu.memory_space<vmem>>, %arg5: memref<1x1x128xf32, #tpu.memory_space<vmem>>, %arg6: memref<1x128x128xbf16, #tpu.memory_space<vmem>>, %arg7: memref<1x1x128xf32, #tpu.memory_space<vmem>>, %arg8: memref<128x128xbf16, #tpu.memory_space<vmem>>, %arg9: memref<1x128xf32, #tpu.memory_space<vmem>>, %arg10: memref<16x128xf32, #tpu.memory_space<vmem>>, %arg11: memref<16x128xf32, #tpu.memory_space<vmem>>, %arg12: memref<16x128xf32, #tpu.memory_space<vmem>>) attributes {dimension_semantics = [#tpu.dimension_semantics<arbitrary>], iteration_bounds = array<i64: 3>, scalar_prefetch = 0 : i64, scratch_operands = 2 : i64, tpu.core_type = #tpu.core_type<tc>, window_params = [{pipeline_mode = #tpu.pipeline_mode<synchronous>, transform_indices = @transform_0, window_bounds = array<i64: 16, 128>}, {pipeline_mode = #tpu.pipeline_mode<synchronous>, transform_indices = @transform_1, window_bounds = array<i64: 16, 16>}, {transform_indices = @transform_2, window_bounds = array<i64: 1, 1, 128>}, {transform_indices = @transform_3, window_bounds = array<i64: 1, 128, 128>}, {transform_indices = @transform_4, window_bounds = array<i64: 1, 1, 128>}, {transform_indices = @transform_5, window_bounds = array<i64: 1, 128, 128>}, {transform_indices = @transform_6, window_bounds = array<i64: 1, 1, 128>}, {pipeline_mode = #tpu.pipeline_mode<synchronous>, transform_indices = @transform_7, window_bounds = array<i64: 128, 128>}, {pipeline_mode = #tpu.pipeline_mode<synchronous>, transform_indices = @transform_8, window_bounds = array<i64: 1, 128>}, {pipeline_mode = #tpu.pipeline_mode<synchronous>, transform_indices = @transform_9, window_bounds = array<i64: 16, 128>}]} {
    %c0_i32 = arith.constant 0 : i32
    %0 = arith.cmpi eq, %arg0, %c0_i32 : i32
    %1 = arith.extui %0 : i1 to i32
    %c0_i32_0 = arith.constant 0 : i32
    %2 = arith.cmpi ne, %1, %c0_i32_0 : i32
    scf.if %2 {
      %c0_31 = arith.constant 0 : index
      %c0_32 = arith.constant 0 : index
      %41 = vector.load %arg1[%c0_31, %c0_32] : memref<16x128xf32, #tpu.memory_space<vmem>>, vector<16x128xf32>
      %c0_33 = arith.constant 0 : index
      %c0_34 = arith.constant 0 : index
      %42 = vector.load %arg11[%c0_33, %c0_34] : memref<16x128xf32, #tpu.memory_space<vmem>>, vector<16x128xf32>
      tpu.vector_store %arg11[%c0_33, %c0_34], %41 {strides = array<i32>} : memref<16x128xf32, #tpu.memory_space<vmem>>, vector<16x128xf32>,
      %cst_35 = arith.constant 0.000000e+00 : f32
      %43 = vector.broadcast %cst_35 : f32 to vector<16x128xf32>
      %c0_36 = arith.constant 0 : index
      %c0_37 = arith.constant 0 : index
      %44 = vector.load %arg12[%c0_36, %c0_37] : memref<16x128xf32, #tpu.memory_space<vmem>>, vector<16x128xf32>
      tpu.vector_store %arg12[%c0_36, %c0_37], %43 {strides = array<i32>} : memref<16x128xf32, #tpu.memory_space<vmem>>, vector<16x128xf32>,
    } else {
    }
    %c0 = arith.constant 0 : index
    %c0_1 = arith.constant 0 : index
    %3 = vector.load %arg11[%c0, %c0_1] : memref<16x128xf32, #tpu.memory_space<vmem>>, vector<16x128xf32>
    %c0_2 = arith.constant 0 : index
    %c0_3 = arith.constant 0 : index
    %4 = vector.load %arg2[%c0_2, %c0_3] : memref<16x16xbf16, #tpu.memory_space<vmem>>, vector<16x16xbf16>
    %cst = arith.constant 0.000000e+00 : f32
    %5 = vector.broadcast %cst : f32 to vector<16x128xf32>
    %6 = arith.maximumf %3, %5 : vector<16x128xf32>
    %7 = arith.truncf %6 : vector<16x128xf32> to vector<16x128xbf16>
    %cst_4 = arith.constant dense<0.000000e+00> : vector<16x128xf32>
    %8 = tpu.matmul %4, %7, %cst_4 {dimension_numbers = #tpu.dot_dimension_numbers<[1], [0], [0], [1], [0, 0, 1, 1], [], []>} : vector<16x16xbf16>, vector<16x128xbf16>, vector<16x128xf32> -> vector<16x128xf32>
    %c0_5 = arith.constant 0 : index
    %c0_6 = arith.constant 0 : index
    %c0_7 = arith.constant 0 : index
    %9 = vector.load %arg3[%c0_5, %c0_6, %c0_7] : memref<1x1x128xf32, #tpu.memory_space<vmem>>, vector<1x1x128xf32>
    %10 = vector.shape_cast %9 : vector<1x1x128xf32> to vector<1x128xf32>
    %11 = vector.broadcast %10 : vector<1x128xf32> to vector<16x128xf32>
    %12 = arith.mulf %11, %3 : vector<16x128xf32>
    %13 = arith.addf %12, %8 : vector<16x128xf32>
    %14 = arith.truncf %13 : vector<16x128xf32> to vector<16x128xbf16>
    %c0_8 = arith.constant 0 : index
    %c0_9 = arith.constant 0 : index
    %c0_10 = arith.constant 0 : index
    %15 = vector.load %arg4[%c0_8, %c0_9, %c0_10] : memref<1x128x128xbf16, #tpu.memory_space<vmem>>, vector<1x128x128xbf16>
    %16 = vector.shape_cast %15 : vector<1x128x128xbf16> to vector<128x128xbf16>
    %cst_11 = arith.constant dense<0.000000e+00> : vector<16x128xf32>
    %17 = tpu.matmul %14, %16, %cst_11 {dimension_numbers = #tpu.dot_dimension_numbers<[1], [0], [0], [1], [0, 0, 1, 1], [], []>} : vector<16x128xbf16>, vector<128x128xbf16>, vector<16x128xf32> -> vector<16x128xf32>
    %c0_12 = arith.constant 0 : index
    %c0_13 = arith.constant 0 : index
    %c0_14 = arith.constant 0 : index
    %18 = vector.load %arg5[%c0_12, %c0_13, %c0_14] : memref<1x1x128xf32, #tpu.memory_space<vmem>>, vector<1x1x128xf32>
    %19 = vector.shape_cast %18 : vector<1x1x128xf32> to vector<1x128xf32>
    %20 = vector.broadcast %19 : vector<1x128xf32> to vector<16x128xf32>
    %21 = arith.addf %17, %20 : vector<16x128xf32>
    %cst_15 = arith.constant 0.000000e+00 : f32
    %22 = vector.broadcast %cst_15 : f32 to vector<16x128xf32>
    %23 = arith.maximumf %21, %22 : vector<16x128xf32>
    %24 = arith.truncf %23 : vector<16x128xf32> to vector<16x128xbf16>
    %c0_16 = arith.constant 0 : index
    %c0_17 = arith.constant 0 : index
    %c0_18 = arith.constant 0 : index
    %25 = vector.load %arg6[%c0_16, %c0_17, %c0_18] : memref<1x128x128xbf16, #tpu.memory_space<vmem>>, vector<1x128x128xbf16>
    %26 = vector.shape_cast %25 : vector<1x128x128xbf16> to vector<128x128xbf16>
    %cst_19 = arith.constant dense<0.000000e+00> : vector<16x128xf32>
    %27 = tpu.matmul %24, %26, %cst_19 {dimension_numbers = #tpu.dot_dimension_numbers<[1], [0], [0], [1], [0, 0, 1, 1], [], []>} : vector<16x128xbf16>, vector<128x128xbf16>, vector<16x128xf32> -> vector<16x128xf32>
    %c0_20 = arith.constant 0 : index
    %c0_21 = arith.constant 0 : index
    %c0_22 = arith.constant 0 : index
    %28 = vector.load %arg7[%c0_20, %c0_21, %c0_22] : memref<1x1x128xf32, #tpu.memory_space<vmem>>, vector<1x1x128xf32>
    %29 = vector.shape_cast %28 : vector<1x1x128xf32> to vector<1x128xf32>
    %30 = vector.broadcast %29 : vector<1x128xf32> to vector<16x128xf32>
    %31 = arith.addf %27, %30 : vector<16x128xf32>
    %cst_23 = arith.constant 0.000000e+00 : f32
    %32 = vector.broadcast %cst_23 : f32 to vector<16x128xf32>
    %33 = arith.maximumf %31, %32 : vector<16x128xf32>
    %c0_24 = arith.constant 0 : index
    %c0_25 = arith.constant 0 : index
    %34 = vector.load %arg11[%c0_24, %c0_25] : memref<16x128xf32, #tpu.memory_space<vmem>>, vector<16x128xf32>
    tpu.vector_store %arg11[%c0_24, %c0_25], %33 {strides = array<i32>} : memref<16x128xf32, #tpu.memory_space<vmem>>, vector<16x128xf32>,
    %c0_26 = arith.constant 0 : index
    %c0_27 = arith.constant 0 : index
    %35 = vector.load %arg12[%c0_26, %c0_27] : memref<16x128xf32, #tpu.memory_space<vmem>>, vector<16x128xf32>
    %36 = arith.addf %35, %33 : vector<16x128xf32>
    %c0_28 = arith.constant 0 : index
    %c0_29 = arith.constant 0 : index
    %37 = vector.load %arg12[%c0_28, %c0_29] : memref<16x128xf32, #tpu.memory_space<vmem>>, vector<16x128xf32>
    tpu.vector_store %arg12[%c0_28, %c0_29], %36 {strides = array<i32>} : memref<16x128xf32, #tpu.memory_space<vmem>>, vector<16x128xf32>,
    %c2_i32 = arith.constant 2 : i32
    %38 = arith.cmpi eq, %arg0, %c2_i32 : i32
    %39 = arith.extui %38 : i1 to i32
    %c0_i32_30 = arith.constant 0 : i32
    %40 = arith.cmpi ne, %39, %c0_i32_30 : i32
    scf.if %40 {
      %c0_31 = arith.constant 0 : index
      %c0_32 = arith.constant 0 : index
      %41 = vector.load %arg12[%c0_31, %c0_32] : memref<16x128xf32, #tpu.memory_space<vmem>>, vector<16x128xf32>
      %42 = arith.truncf %41 : vector<16x128xf32> to vector<16x128xbf16>
      %c0_33 = arith.constant 0 : index
      %c0_34 = arith.constant 0 : index
      %43 = vector.load %arg8[%c0_33, %c0_34] : memref<128x128xbf16, #tpu.memory_space<vmem>>, vector<128x128xbf16>
      %cst_35 = arith.constant dense<0.000000e+00> : vector<16x128xf32>
      %44 = tpu.matmul %42, %43, %cst_35 {dimension_numbers = #tpu.dot_dimension_numbers<[1], [0], [0], [1], [0, 0, 1, 1], [], []>} : vector<16x128xbf16>, vector<128x128xbf16>, vector<16x128xf32> -> vector<16x128xf32>
      %c0_36 = arith.constant 0 : index
      %c0_37 = arith.constant 0 : index
      %45 = vector.load %arg9[%c0_36, %c0_37] : memref<1x128xf32, #tpu.memory_space<vmem>>, vector<1x128xf32>
      %46 = vector.broadcast %45 : vector<1x128xf32> to vector<16x128xf32>
      %47 = arith.addf %44, %46 : vector<16x128xf32>
      %c0_38 = arith.constant 0 : index
      %c0_39 = arith.constant 0 : index
      %48 = vector.load %arg10[%c0_38, %c0_39] : memref<16x128xf32, #tpu.memory_space<vmem>>, vector<16x128xf32>
      tpu.vector_store %arg10[%c0_38, %c0_39], %47 {strides = array<i32>} : memref<16x128xf32, #tpu.memory_space<vmem>>, vector<16x128xf32>,
    } else {
    }
    return
  }
  func.func @transform_0(%arg0: i32) -> (i32, i32) {
    %c0_i32 = arith.constant 0 : i32
    %c0_i32_0 = arith.constant 0 : i32
    %c0_i32_1 = arith.constant 0 : i32
    return %c0_i32, %c0_i32_0 : i32, i32
  }
  func.func @transform_1(%arg0: i32) -> (i32, i32) {
    %c0_i32 = arith.constant 0 : i32
    %c0_i32_0 = arith.constant 0 : i32
    %c0_i32_1 = arith.constant 0 : i32
    return %c0_i32, %c0_i32_0 : i32, i32
  }
  func.func @transform_2(%arg0: i32) -> (i32, i32, i32) {
    %c0_i32 = arith.constant 0 : i32
    %c0_i32_0 = arith.constant 0 : i32
    %c0_i32_1 = arith.constant 0 : i32
    return %arg0, %c0_i32, %c0_i32_0 : i32, i32, i32
  }
  func.func @transform_3(%arg0: i32) -> (i32, i32, i32) {
    %c0_i32 = arith.constant 0 : i32
    %c0_i32_0 = arith.constant 0 : i32
    %c0_i32_1 = arith.constant 0 : i32
    return %arg0, %c0_i32, %c0_i32_0 : i32, i32, i32
  }
  func.func @transform_4(%arg0: i32) -> (i32, i32, i32) {
    %c0_i32 = arith.constant 0 : i32
    %c0_i32_0 = arith.constant 0 : i32
    %c0_i32_1 = arith.constant 0 : i32
    return %arg0, %c0_i32, %c0_i32_0 : i32, i32, i32
  }
  func.func @transform_5(%arg0: i32) -> (i32, i32, i32) {
    %c0_i32 = arith.constant 0 : i32
    %c0_i32_0 = arith.constant 0 : i32
    %c0_i32_1 = arith.constant 0 : i32
    return %arg0, %c0_i32, %c0_i32_0 : i32, i32, i32
  }
  func.func @transform_6(%arg0: i32) -> (i32, i32, i32) {
    %c0_i32 = arith.constant 0 : i32
    %c0_i32_0 = arith.constant 0 : i32
    %c0_i32_1 = arith.constant 0 : i32
    return %arg0, %c0_i32, %c0_i32_0 : i32, i32, i32
  }
  func.func @transform_7(%arg0: i32) -> (i32, i32) {
    %c0_i32 = arith.constant 0 : i32
    %c0_i32_0 = arith.constant 0 : i32
    %c0_i32_1 = arith.constant 0 : i32
    return %c0_i32, %c0_i32_0 : i32, i32
  }
  func.func @transform_8(%arg0: i32) -> (i32, i32) {
    %c0_i32 = arith.constant 0 : i32
    %c0_i32_0 = arith.constant 0 : i32
    %c0_i32_1 = arith.constant 0 : i32
    return %c0_i32, %c0_i32_0 : i32, i32
  }
  func.func @transform_9(%arg0: i32) -> (i32, i32) {
    %c0_i32 = arith.constant 0 : i32
    %c0_i32_0 = arith.constant 0 : i32
    %c0_i32_1 = arith.constant 0 : i32
    return %c0_i32, %c0_i32_0 : i32, i32
  }
}

</mosaic_0001>

<llo_original>
// kernel: tpu_custom_call.1
$region0: #{tpu_custom_call.1}
  #allocation0 [shape = 'u32[]', space=smem, size = 0x4, offset = 0x4, fixed_abs, tag = 'smem constant byte address 0x4 - core index']
  #allocation1 [shape = 'u32[144,128]{1,0:T(1,128)}', space=vmem, size = 0x12000, scoped, tag = 'internal scratch']
  #allocation2 [shape = 'f32[16,128]{1,0:T(8,128)}', space=vmem, size = 0x2000, scoped, tag = 'scratch operand']
  #allocation3 [shape = 'f32[16,128]{1,0:T(8,128)}', space=vmem, size = 0x2000, scoped, tag = 'scratch operand']
  %s0 = inlined_call_operand.hbm [shape: f32[16,128], index: 0, kind: input, shape index: {}]
  %s1 = inlined_call_operand.hbm [shape: bf16[16,16], index: 1, kind: input, shape index: {}]
  %s2 = inlined_call_operand.vmem [shape: f32[3,1,128], index: 2, kind: input, shape index: {}]
  %s3 = inlined_call_operand.hbm [shape: bf16[3,128,128], index: 3, kind: input, shape index: {}]
  %s4 = inlined_call_operand.vmem [shape: f32[3,1,128], index: 4, kind: input, shape index: {}]
  %s5 = inlined_call_operand.hbm [shape: bf16[3,128,128], index: 5, kind: input, shape index: {}]
  %s6 = inlined_call_operand.vmem [shape: f32[3,1,128], index: 6, kind: input, shape index: {}]
  %s7 = inlined_call_operand.hbm [shape: bf16[128,128], index: 7, kind: input, shape index: {}]
  %s8 = inlined_call_operand.vmem [shape: f32[1,128], index: 8, kind: input, shape index: {}]
  %s9 = inlined_call_operand.hbm [shape: f32[16,128], index: 9, kind: output, shape index: {}]
  %s10 = sld [smem:[#allocation0]]
  $region97: #{tpu_custom_call.1} parent=0
    _
  %s12 = ssub.s32 1, %s10
  %s13 = scalar_select 0, %s12, %s10
  $region1: #{tpu_custom_call.1} parent=0
    #allocation4 [shape = 'u8[8192]{0}', space=vmem, size = 0x2000, scoped, tag = 'input window, operand 0, single buffered']
    #allocation5 [shape = 's32[2]{0}', space=sflag, size = 0x8, scoped, tag = 'scoped memory for tpu_custom_call.1']
    #allocation6 [shape = 's32[2]{0}', space=sflag, size = 0x8, scoped, tag = 'scoped memory for tpu_custom_call.1']
    #allocation7 [shape = 'u8[4096]{0}', space=vmem, size = 0x1000, scoped, tag = 'input window, operand 1, single buffered']
    #allocation8 [shape = 's32[1]{0}', space=sflag, size = 0x4, scoped, tag = 'scoped memory for tpu_custom_call.1']
    #allocation9 [shape = 'u8[65536]{0}', space=vmem, size = 0x10000, scoped, tag = 'input window, operand 3']
    #allocation10 [shape = 'u8[65536]{0}', space=vmem, size = 0x10000, scoped, tag = 'input window, operand 5']
    #allocation11 [shape = 'u8[32768]{0}', space=vmem, size = 0x8000, scoped, tag = 'input window, operand 7, single buffered']
    #allocation12 [shape = 'u8[8192]{0}', space=vmem, size = 0x2000, scoped, tag = 'output window, operand 0, single buffered']
    %14 = vsyncpa [#allocation5], 0
    %15 = vsyncpa [#allocation8], 0
    %16 = vsyncpa [#allocation6], 0
    loop: start=0, step=1, limit=5
    $region2: #{tpu_custom_call.1} parent=1 // loop_pre_header
      _
    $region3: #{tpu_custom_call.1} parent=1 // loop_header
      %s18 = sphi 0, %s22
      %p19 = scmp.ge.s32.totalorder %s18, 5
      %s26 = sphi 0, %s26
      %s28 = sphi 0, %s26
      %s29 = sphi 0, %s28
      %s43 = sphi 0, %s29
      %s47 = sphi 0, %s47
      %s49 = sphi 0, %s47
      %s50 = sphi 0, %s49
      %s64 = sphi 0, %s50
      %s70 = sphi 0, %s72
      %s73 = sphi 0, %s70
      %s74 = sphi 0, %s73
      %s90 = sphi 0, %s74
      %s96 = sphi 0, %s98
      %s99 = sphi 0, %s96
      %s100 = sphi 0, %s99
      %s116 = sphi 0, %s100
      %s122 = sphi 0, %s124
      %s125 = sphi 0, %s122
      %s126 = sphi 0, %s125
      %s142 = sphi 0, %s126
      %s148 = sphi 0, %s150
      %s151 = sphi 0, %s148
      %s152 = sphi 0, %s151
      %s168 = sphi 0, %s152
      %s174 = sphi 0, %s176
      %s177 = sphi 0, %s174
      %s178 = sphi 0, %s177
      %s194 = sphi 0, %s178
      %s198 = sphi 0, %s198
      %s200 = sphi 0, %s198
      %s201 = sphi 0, %s200
      %s215 = sphi 0, %s201
      %s219 = sphi 0, %s219
      %s221 = sphi 0, %s219
      %s222 = sphi 0, %s221
      %s236 = sphi 0, %s222
      %s240 = sphi 0, %s240
      %s242 = sphi 0, %s240
      %s243 = sphi 0, %s242
      %s257 = sphi 0, %s243
    $region4: #{tpu_custom_call.1} parent=1 // loop_header_branch
      %21 = sbr.rel (%p19) target = $region8
    $region5: #{tpu_custom_call.1} parent=1 // loop_body
      %s23 = ssub.s32 %s18, 1
      %s24 = ssub.s32 %s18, 2
      %s25 = sadd.s32 %s18, 1
      %s27 = sadd.s32 %s26, 1
      %p30 = scmp.eq.s32.totalorder %s18, 2
      %p31 = scmp.ne.s32.totalorder %s26, %s28
      %p32 = scmp.eq.s32.totalorder %s18, 0
      %p33 = por %p31, %p32
      %p34 = scmp.ne.s32.totalorder %s26, %s28
      %p35 = scmp.eq.s32.totalorder %s23, 2
      %p36 = por %p34, %p35
      %p37 = scmp.ne.s32.totalorder %s28, %s29
      %p38 = scmp.eq.s32.totalorder %s23, 0
      %p39 = por %p37, %p38
      %p40 = scmp.ne.s32.totalorder %s28, %s29
      %p41 = scmp.eq.s32.totalorder %s24, 2
      %p42 = por %p40, %p41
      %p44 = scmp.ne.s32.totalorder %s29, %s43
      %p45 = scmp.eq.s32.totalorder %s24, 0
      %p46 = por %p44, %p45
      %s48 = sadd.s32 %s47, 1
      %p51 = scmp.eq.s32.totalorder %s18, 2
      %p52 = scmp.ne.s32.totalorder %s47, %s49
      %p53 = scmp.eq.s32.totalorder %s18, 0
      %p54 = por %p52, %p53
      %p55 = scmp.ne.s32.totalorder %s47, %s49
      %p56 = scmp.eq.s32.totalorder %s23, 2
      %p57 = por %p55, %p56
      %p58 = scmp.ne.s32.totalorder %s49, %s50
      %p59 = scmp.eq.s32.totalorder %s23, 0
      %p60 = por %p58, %p59
      %p61 = scmp.ne.s32.totalorder %s49, %s50
      %p62 = scmp.eq.s32.totalorder %s24, 2
      %p63 = por %p61, %p62
      %p65 = scmp.ne.s32.totalorder %s50, %s64
      %p66 = scmp.eq.s32.totalorder %s24, 0
      %p67 = por %p65, %p66
      %s68 = ssub.s32 %s18, %s25
      %p69 = scmp.eq.s32.totalorder %s68, 0
      %s71 = sadd.s32 %s70, 1
      %s72 = scalar_select %p69, %s70, %s71
      %p75 = pneg %p69
      %p76 = scmp.eq.s32.totalorder %s18, 2
      %p77 = por %p75, %p76
      %p78 = scmp.ne.s32.totalorder %s70, %s73
      %p79 = scmp.eq.s32.totalorder %s18, 0
      %p80 = por %p78, %p79
      %p81 = scmp.ne.s32.totalorder %s70, %s73
      %p82 = scmp.eq.s32.totalorder %s23, 2
      %p83 = por %p81, %p82
      %p84 = scmp.ne.s32.totalorder %s73, %s74
      %p85 = scmp.eq.s32.totalorder %s23, 0
      %p86 = por %p84, %p85
      %p87 = scmp.ne.s32.totalorder %s73, %s74
      %p88 = scmp.eq.s32.totalorder %s24, 2
      %p89 = por %p87, %p88
      %p91 = scmp.ne.s32.totalorder %s74, %s90
      %p92 = scmp.eq.s32.totalorder %s24, 0
      %p93 = por %p91, %p92
      %s94 = ssub.s32 %s18, %s25
      %p95 = scmp.eq.s32.totalorder %s94, 0
      %s97 = sadd.s32 %s96, 1
      %s98 = scalar_select %p95, %s96, %s97
      %p101 = pneg %p95
      %p102 = scmp.eq.s32.totalorder %s18, 2
      %p103 = por %p101, %p102
      %p104 = scmp.ne.s32.totalorder %s96, %s99
      %p105 = scmp.eq.s32.totalorder %s18, 0
      %p106 = por %p104, %p105
      %p107 = scmp.ne.s32.totalorder %s96, %s99
      %p108 = scmp.eq.s32.totalorder %s23, 2
      %p109 = por %p107, %p108
      %p110 = scmp.ne.s32.totalorder %s99, %s100
      %p111 = scmp.eq.s32.totalorder %s23, 0
      %p112 = por %p110, %p111
      %p113 = scmp.ne.s32.totalorder %s99, %s100
      %p114 = scmp.eq.s32.totalorder %s24, 2
      %p115 = por %p113, %p114
      %p117 = scmp.ne.s32.totalorder %s100, %s116
      %p118 = scmp.eq.s32.totalorder %s24, 0
      %p119 = por %p117, %p118
      %s120 = ssub.s32 %s18, %s25
      %p121 = scmp.eq.s32.totalorder %s120, 0
      %s123 = sadd.s32 %s122, 1
      %s124 = scalar_select %p121, %s122, %s123
      %p127 = pneg %p121
      %p128 = scmp.eq.s32.totalorder %s18, 2
      %p129 = por %p127, %p128
      %p130 = scmp.ne.s32.totalorder %s122, %s125
      %p131 = scmp.eq.s32.totalorder %s18, 0
      %p132 = por %p130, %p131
      %p133 = scmp.ne.s32.totalorder %s122, %s125
      %p134 = scmp.eq.s32.totalorder %s23, 2
      %p135 = por %p133, %p134
      %p136 = scmp.ne.s32.totalorder %s125, %s126
      %p137 = scmp.eq.s32.totalorder %s23, 0
      %p138 = por %p136, %p137
      %p139 = scmp.ne.s32.totalorder %s125, %s126
      %p140 = scmp.eq.s32.totalorder %s24, 2
      %p141 = por %p139, %p140
      %p143 = scmp.ne.s32.totalorder %s126, %s142
      %p144 = scmp.eq.s32.totalorder %s24, 0
      %p145 = por %p143, %p144
      %s146 = ssub.s32 %s18, %s25
      %p147 = scmp.eq.s32.totalorder %s146, 0
      %s149 = sadd.s32 %s148, 1
      %s150 = scalar_select %p147, %s148, %s149
      %p153 = pneg %p147
      %p154 = scmp.eq.s32.totalorder %s18, 2
      %p155 = por %p153, %p154
      %p156 = scmp.ne.s32.totalorder %s148, %s151
      %p157 = scmp.eq.s32.totalorder %s18, 0
      %p158 = por %p156, %p157
      %p159 = scmp.ne.s32.totalorder %s148, %s151
      %p160 = scmp.eq.s32.totalorder %s23, 2
      %p161 = por %p159, %p160
      %p162 = scmp.ne.s32.totalorder %s151, %s152
      %p163 = scmp.eq.s32.totalorder %s23, 0
      %p164 = por %p162, %p163
      %p165 = scmp.ne.s32.totalorder %s151, %s152
      %p166 = scmp.eq.s32.totalorder %s24, 2
      %p167 = por %p165, %p166
      %p169 = scmp.ne.s32.totalorder %s152, %s168
      %p170 = scmp.eq.s32.totalorder %s24, 0
      %p171 = por %p169, %p170
      %s172 = ssub.s32 %s18, %s25
      %p173 = scmp.eq.s32.totalorder %s172, 0
      %s175 = sadd.s32 %s174, 1
      %s176 = scalar_select %p173, %s174, %s175
      %p179 = pneg %p173
      %p180 = scmp.eq.s32.totalorder %s18, 2
      %p181 = por %p179, %p180
      %p182 = scmp.ne.s32.totalorder %s174, %s177
      %p183 = scmp.eq.s32.totalorder %s18, 0
      %p184 = por %p182, %p183
      %p185 = scmp.ne.s32.totalorder %s174, %s177
      %p186 = scmp.eq.s32.totalorder %s23, 2
      %p187 = por %p185, %p186
      %p188 = scmp.ne.s32.totalorder %s177, %s178
      %p189 = scmp.eq.s32.totalorder %s23, 0
      %p190 = por %p188, %p189
      %p191 = scmp.ne.s32.totalorder %s177, %s178
      %p192 = scmp.eq.s32.totalorder %s24, 2
      %p193 = por %p191, %p192
      %p195 = scmp.ne.s32.totalorder %s178, %s194
      %p196 = scmp.eq.s32.totalorder %s24, 0
      %p197 = por %p195, %p196
      %s199 = sadd.s32 %s198, 1
      %p202 = scmp.eq.s32.totalorder %s18, 2
      %p203 = scmp.ne.s32.totalorder %s198, %s200
      %p204 = scmp.eq.s32.totalorder %s18, 0
      %p205 = por %p203, %p204
      %p206 = scmp.ne.s32.totalorder %s198, %s200
      %p207 = scmp.eq.s32.totalorder %s23, 2
      %p208 = por %p206, %p207
      %p209 = scmp.ne.s32.totalorder %s200, %s201
      %p210 = scmp.eq.s32.totalorder %s23, 0
      %p211 = por %p209, %p210
      %p212 = scmp.ne.s32.totalorder %s200, %s201
      %p213 = scmp.eq.s32.totalorder %s24, 2
      %p214 = por %p212, %p213
      %p216 = scmp.ne.s32.totalorder %s201, %s215
      %p217 = scmp.eq.s32.totalorder %s24, 0
      %p218 = por %p216, %p217
      %s220 = sadd.s32 %s219, 1
      %p223 = scmp.eq.s32.totalorder %s18, 2
      %p224 = scmp.ne.s32.totalorder %s219, %s221
      %p225 = scmp.eq.s32.totalorder %s18, 0
      %p226 = por %p224, %p225
      %p227 = scmp.ne.s32.totalorder %s219, %s221
      %p228 = scmp.eq.s32.totalorder %s23, 2
      %p229 = por %p227, %p228
      %p230 = scmp.ne.s32.totalorder %s221, %s222
      %p231 = scmp.eq.s32.totalorder %s23, 0
      %p232 = por %p230, %p231
      %p233 = scmp.ne.s32.totalorder %s221, %s222
      %p234 = scmp.eq.s32.totalorder %s24, 2
      %p235 = por %p233, %p234
      %p237 = scmp.ne.s32.totalorder %s222, %s236
      %p238 = scmp.eq.s32.totalorder %s24, 0
      %p239 = por %p237, %p238
      %s241 = sadd.s32 %s240, 1
      %p244 = scmp.eq.s32.totalorder %s18, 2
      %p245 = scmp.ne.s32.totalorder %s240, %s242
      %p246 = scmp.eq.s32.totalorder %s18, 0
      %p247 = por %p245, %p246
      %p248 = scmp.ne.s32.totalorder %s240, %s242
      %p249 = scmp.eq.s32.totalorder %s23, 2
      %p250 = por %p248, %p249
      %p251 = scmp.ne.s32.totalorder %s242, %s243
      %p252 = scmp.eq.s32.totalorder %s23, 0
      %p253 = por %p251, %p252
      %p254 = scmp.ne.s32.totalorder %s242, %s243
      %p255 = scmp.eq.s32.totalorder %s24, 2
      %p256 = por %p254, %p255
      %p258 = scmp.ne.s32.totalorder %s243, %s257
      %p259 = scmp.eq.s32.totalorder %s24, 0
      %p260 = por %p258, %p259
      %p261 = scmp.le.s32.totalorder 1, %s18
      %p262 = scmp.lt.s32.totalorder %s18, 4
      %p263 = pnand %p261, %p262
      %p264 = pneg %p263
      // Predicated region
      $region9: #{tpu_custom_call.1} parent=5 // pred_check
        _
      $region10: #{tpu_custom_call.1} parent=5 // pred_check_branch
        %266 = sbr.rel (%p263) target = $region12
      $region11: #{tpu_custom_call.1} parent=5 // pred_region
        %s267 = ssub.s32 %s18, 1
        // Predicated region
        $region13: #{tpu_custom_call.1} parent=11 // pred_check
          %p268 = pneg %p39
        $region14: #{tpu_custom_call.1} parent=11 // pred_check_branch
          %270 = sbr.rel (%p268) target = $region16
        $region15: #{tpu_custom_call.1} parent=11 // pred_region
          %s272 = ssub.s32 256, 256
          %273 = vsyncadd [#allocation5], %s272
          %s274 = sshll.u32 [#allocation4], 4
          %s275 = int_to_ptr.vmem [resolvable:$true] %s274
          %280 = dma.hbm_to_vmem [thread:$0]  %s0, 256, %s275, [#allocation5], 128, 128, 8
        $region16: #{tpu_custom_call.1} parent=11 // pred_fallthru
          _
        // Predicated region
        $region17: #{tpu_custom_call.1} parent=11 // pred_check
          %p281 = pneg %p60
        $region18: #{tpu_custom_call.1} parent=11 // pred_check_branch
          %283 = sbr.rel (%p281) target = $region20
        $region19: #{tpu_custom_call.1} parent=11 // pred_region
          %s285 = ssub.s32 128, 128
          %286 = vsyncadd [#allocation8], %s285
          %s287 = sshll.u32 [#allocation7], 4
          %s288 = int_to_ptr.vmem [resolvable:$true] %s287
          %293 = dma.hbm_to_vmem [thread:$0]  %s1, 128, %s288, [#allocation8], 64, 64, 4
        $region20: #{tpu_custom_call.1} parent=11 // pred_fallthru
          _
        // Predicated region
        $region21: #{tpu_custom_call.1} parent=11 // pred_check
          %p294 = pneg %p211
        $region22: #{tpu_custom_call.1} parent=11 // pred_check_branch
          %296 = sbr.rel (%p294) target = $region24
        $region23: #{tpu_custom_call.1} parent=11 // pred_region
          %s298 = ssub.s32 1024, 1024
          %299 = vsyncadd [#allocation8], %s298
          %s300 = sshll.u32 [#allocation11], 4
          %s301 = int_to_ptr.vmem [resolvable:$true] %s300
          %306 = dma.hbm_to_vmem [thread:$0]  %s7, 1024, %s301, [#allocation8], 64, 64, 4
        $region24: #{tpu_custom_call.1} parent=11 // pred_fallthru
          _
        // Predicated region
        $region25: #{tpu_custom_call.1} parent=11 // pred_check
          %p307 = pneg %p232
        $region26: #{tpu_custom_call.1} parent=11 // pred_check_branch
          %309 = sbr.rel (%p307) target = $region28
        $region27: #{tpu_custom_call.1} parent=11 // pred_region
          _
        $region28: #{tpu_custom_call.1} parent=11 // pred_fallthru
          _
      $region12: #{tpu_custom_call.1} parent=5 // pred_fallthru
        _
      %p310 = scmp.lt.s32.totalorder %s18, 3
      // Predicated region
      $region29: #{tpu_custom_call.1} parent=5 // pred_check
        %p311 = pneg %p310
      $region30: #{tpu_custom_call.1} parent=5 // pred_check_branch
        %313 = sbr.rel (%p311) target = $region32
      $region31: #{tpu_custom_call.1} parent=5 // pred_region
        // Predicated region
        $region33: #{tpu_custom_call.1} parent=31 // pred_check
          %p314 = pneg %p80
        $region34: #{tpu_custom_call.1} parent=31 // pred_check_branch
          %316 = sbr.rel (%p314) target = $region36
        $region35: #{tpu_custom_call.1} parent=31 // pred_region
          %p317 = scmp.lt.s32.totalorder %s18, 2
          %s318 = scalar_select %p317, %s18, 2
          %s319 = scalar_lea.vmem %s2, %s318
        $region36: #{tpu_custom_call.1} parent=31 // pred_fallthru
          _
        // Predicated region
        $region37: #{tpu_custom_call.1} parent=31 // pred_check
          %p320 = pneg %p106
        $region38: #{tpu_custom_call.1} parent=31 // pred_check_branch
          %322 = sbr.rel (%p320) target = $region40
        $region39: #{tpu_custom_call.1} parent=31 // pred_region
          %s323 = sand.u32 %s18, 1
          %s324 = scalar_lea.sflag [#allocation5], %s323
          %s325 = sand.u32 %s96, 1
          %s326 = smul.addr %s325, 64
          %s327 = scalar_lea.vmem [#allocation9], %s326
          %s329 = ssub.s32 1024, 1024
          %330 = vsyncadd %s324, %s329
          %s331 = smul.addr %s18, 16
          %s332 = smul.addr %s331, 64
          %s333 = scalar_lea.hbm %s3, %s332
          %s334 = sshll.u32 %s327, 4
          %s335 = int_to_ptr.vmem [resolvable:$true] %s334
          %340 = dma.hbm_to_vmem [thread:$0]  %s333, 1024, %s335, %s324, 64, 64, 4
        $region40: #{tpu_custom_call.1} parent=31 // pred_fallthru
          _
        // Predicated region
        $region41: #{tpu_custom_call.1} parent=31 // pred_check
          %p341 = pneg %p132
        $region42: #{tpu_custom_call.1} parent=31 // pred_check_branch
          %343 = sbr.rel (%p341) target = $region44
        $region43: #{tpu_custom_call.1} parent=31 // pred_region
          %p344 = scmp.lt.s32.totalorder %s18, 2
          %s345 = scalar_select %p344, %s18, 2
          %s346 = scalar_lea.vmem %s4, %s345
        $region44: #{tpu_custom_call.1} parent=31 // pred_fallthru
          _
        // Predicated region
        $region45: #{tpu_custom_call.1} parent=31 // pred_check
          %p347 = pneg %p158
        $region46: #{tpu_custom_call.1} parent=31 // pred_check_branch
          %349 = sbr.rel (%p347) target = $region48
        $region47: #{tpu_custom_call.1} parent=31 // pred_region
          %s350 = sand.u32 %s18, 1
          %s351 = scalar_lea.sflag [#allocation5], %s350
          %s352 = sand.u32 %s148, 1
          %s353 = smul.addr %s352, 64
          %s354 = scalar_lea.vmem [#allocation10], %s353
          %s356 = ssub.s32 1024, 1024
          %357 = vsyncadd %s351, %s356
          %s358 = smul.addr %s18, 16
          %s359 = smul.addr %s358, 64
          %s360 = scalar_lea.hbm %s5, %s359
          %s361 = sshll.u32 %s354, 4
          %s362 = int_to_ptr.vmem [resolvable:$true] %s361
          %367 = dma.hbm_to_vmem [thread:$0]  %s360, 1024, %s362, %s351, 64, 64, 4
        $region48: #{tpu_custom_call.1} parent=31 // pred_fallthru
          _
        // Predicated region
        $region49: #{tpu_custom_call.1} parent=31 // pred_check
          %p368 = pneg %p184
        $region50: #{tpu_custom_call.1} parent=31 // pred_check_branch
          %370 = sbr.rel (%p368) target = $region52
        $region51: #{tpu_custom_call.1} parent=31 // pred_region
          %p371 = scmp.lt.s32.totalorder %s18, 2
          %s372 = scalar_select %p371, %s18, 2
          %s373 = scalar_lea.vmem %s6, %s372
        $region52: #{tpu_custom_call.1} parent=31 // pred_fallthru
          _
      $region32: #{tpu_custom_call.1} parent=5 // pred_fallthru
        _
      %p374 = scmp.le.s32.totalorder 1, %s18
      %p375 = scmp.lt.s32.totalorder %s18, 4
      %p376 = pnand %p374, %p375
      %p377 = pneg %p376
      // Predicated region
      $region53: #{tpu_custom_call.1} parent=5 // pred_check
        _
      $region54: #{tpu_custom_call.1} parent=5 // pred_check_branch
        %379 = sbr.rel (%p376) target = $region56
      $region55: #{tpu_custom_call.1} parent=5 // pred_region
        %s380 = ssub.s32 %s18, 1
        // Predicated region
        $region57: #{tpu_custom_call.1} parent=55 // pred_check
          %p381 = pneg %p39
        $region58: #{tpu_custom_call.1} parent=55 // pred_check_branch
          %383 = sbr.rel (%p381) target = $region60
        $region59: #{tpu_custom_call.1} parent=55 // pred_region
          %384 = dma.done [#allocation5], 256
        $region60: #{tpu_custom_call.1} parent=55 // pred_fallthru
          _
        // Predicated region
        $region61: #{tpu_custom_call.1} parent=55 // pred_check
          %p385 = pneg %p60
        $region62: #{tpu_custom_call.1} parent=55 // pred_check_branch
          %387 = sbr.rel (%p385) target = $region64
        $region63: #{tpu_custom_call.1} parent=55 // pred_region
          %388 = dma.done [#allocation8], 128
        $region64: #{tpu_custom_call.1} parent=55 // pred_fallthru
          _
        %s389 = sand.u32 %s23, 1
        %s390 = scalar_lea.sflag [#allocation5], %s389
        %s391 = sand.u32 %s99, 1
        %s392 = smul.addr %s391, 64
        %s393 = scalar_lea.vmem [#allocation9], %s392
        // Predicated region
        $region65: #{tpu_custom_call.1} parent=55 // pred_check
          %p394 = pneg %p112
        $region66: #{tpu_custom_call.1} parent=55 // pred_check_branch
          %396 = sbr.rel (%p394) target = $region68
        $region67: #{tpu_custom_call.1} parent=55 // pred_region
          %397 = dma.done %s390, 1024
        $region68: #{tpu_custom_call.1} parent=55 // pred_fallthru
          _
        %s398 = sand.u32 %s23, 1
        %s399 = scalar_lea.sflag [#allocation5], %s398
        %s400 = sand.u32 %s151, 1
        %s401 = smul.addr %s400, 64
        %s402 = scalar_lea.vmem [#allocation10], %s401
        // Predicated region
        $region69: #{tpu_custom_call.1} parent=55 // pred_check
          %p403 = pneg %p164
        $region70: #{tpu_custom_call.1} parent=55 // pred_check_branch
          %405 = sbr.rel (%p403) target = $region72
        $region71: #{tpu_custom_call.1} parent=55 // pred_region
          %406 = dma.done %s399, 1024
        $region72: #{tpu_custom_call.1} parent=55 // pred_fallthru
          _
        // Predicated region
        $region73: #{tpu_custom_call.1} parent=55 // pred_check
          %p407 = pneg %p211
        $region74: #{tpu_custom_call.1} parent=55 // pred_check_branch
          %409 = sbr.rel (%p407) target = $region76
        $region75: #{tpu_custom_call.1} parent=55 // pred_region
          %410 = dma.done [#allocation8], 1024
        $region76: #{tpu_custom_call.1} parent=55 // pred_fallthru
          _
        %p411 = pneg %p39
        %p412 = pneg %p36
        %p413 = pneg %p60
        %p414 = pneg %p57
        %p415 = scmp.lt.s32.totalorder %s23, 2
        %s416 = scalar_select %p415, %s23, 2
        %s417 = scalar_lea.vmem %s2, %s416
        %p418 = pneg %p86
        %p419 = pneg %p83
        %s420 = sand.u32 %s23, 1
        %s421 = scalar_lea.sflag [#allocation5], %s420
        %s422 = sand.u32 %s99, 1
        %s423 = smul.addr %s422, 64
        %s424 = scalar_lea.vmem [#allocation9], %s423
        %p425 = pneg %p112
        %p426 = pneg %p109
        %p427 = scmp.lt.s32.totalorder %s23, 2
        %s428 = scalar_select %p427, %s23, 2
        %s429 = scalar_lea.vmem %s4, %s428
        %p430 = pneg %p138
        %p431 = pneg %p135
        %s432 = sand.u32 %s23, 1
        %s433 = scalar_lea.sflag [#allocation5], %s432
        %s434 = sand.u32 %s151, 1
        %s435 = smul.addr %s434, 64
        %s436 = scalar_lea.vmem [#allocation10], %s435
        %p437 = pneg %p164
        %p438 = pneg %p161
        %p439 = scmp.lt.s32.totalorder %s23, 2
        %s440 = scalar_select %p439, %s23, 2
        %s441 = scalar_lea.vmem %s6, %s440
        %p442 = pneg %p190
        %p443 = pneg %p187
        %p444 = pneg %p211
        %p445 = pneg %p208
        %p446 = pneg %p232
        %p447 = pneg %p229
        %p448 = pneg %p253
        %p449 = pneg %p250
        %p450 = scmp.lt.s32.totalorder %s23, 2
        %s451 = scalar_select %p450, %s23, 2
        %s452 = scalar_lea.vmem %s2, %s451
        %p453 = scmp.lt.s32.totalorder %s23, 2
        %s454 = scalar_select %p453, %s23, 2
        %s455 = scalar_lea.vmem %s4, %s454
        %p456 = scmp.lt.s32.totalorder %s23, 2
        %s457 = scalar_select %p456, %s23, 2
        %s458 = scalar_lea.vmem %s6, %s457
        %p460 = scmp.eq.s32.totalorder %s23, 0
        // Predicated region
        $region77: #{tpu_custom_call.1} parent=55 // pred_check
          %p461 = pneg %p460
        $region78: #{tpu_custom_call.1} parent=55 // pred_check_branch
          %463 = sbr.rel (%p461) target = $region80
        $region79: #{tpu_custom_call.1} parent=55 // pred_region
          %v464 = vld [vmem:[#allocation4] sm:$0xff]
          %v465 = vld [vmem:[#allocation4 + $0x8] sm:$0xff]
          %466 = vst [vmem:[#allocation2] sm:$0xff] %v464
          %467 = vst [vmem:[#allocation2 + $0x8] sm:$0xff] %v465
          %468 = vst [vmem:[#allocation3] sm:$0xff] 0.0
          %469 = vst [vmem:[#allocation3 + $0x8] sm:$0xff] 0.0
        $region80: #{tpu_custom_call.1} parent=55 // pred_fallthru
          _
        %v470 = vld [vmem:[#allocation2] sm:$0xff]
        %v471 = vld [vmem:[#allocation2 + $0x8] sm:$0xff]
        %v472 = vld [vmem:[#allocation7] sm:$0xf]
        %v473 = vld [vmem:[#allocation7 + $0x4] sm:$0xf]
        %v474 = vmax.f32 %v470, 0.0
        %v475 = vmax.f32 %v471, 0.0
        %v476 = vpack.c.bf16 %v475, %v474
        %v479 = vunpack.c.l.b16 %v472
        %v480 = vunpack.c.l.b16 %v473
        %v481 = vpack.c.b16 %v480, %v479
        %vm482 = vcmask 130048
        %v484 = vsel %vm482, %v481, 0
        %486 = vmatprep.subr.bf16.mxu0 0
        %487 = vmatpush1.bf16.msra.mxu0 %v476
        %488 = vmatprep.subr.bf16.mxu0 0
        %489 = vmatpush1.bf16.msra.mxu0 0
        %490 = vmatprep.subr.bf16.mxu0 0
        %491 = vmatpush1.bf16.msra.mxu0 0
        %492 = vmatprep.subr.bf16.mxu0 0
        %493 = vmatpush1.bf16.msra.mxu0 0
        %494 = vmatprep.subr.bf16.mxu0 0
        %495 = vmatpush1.bf16.msra.mxu0 0
        %496 = vmatprep.subr.bf16.mxu0 0
        %497 = vmatpush1.bf16.msra.mxu0 0
        %498 = vmatprep.subr.bf16.mxu0 0
        %499 = vmatpush1.bf16.msra.mxu0 0
        %500 = vmatprep.subr.bf16.mxu0 0
        %501 = vmatpush1.bf16.msra.mxu0 0
        %502 = vmatprep.subr.bf16.mxu0 0
        %503 = vmatpush1.bf16.msra.mxu0 0
        %504 = vmatprep.subr.bf16.mxu0 0
        %505 = vmatpush1.bf16.msra.mxu0 0
        %506 = vmatprep.subr.bf16.mxu0 0
        %507 = vmatpush1.bf16.msra.mxu0 0
        %508 = vmatprep.subr.bf16.mxu0 0
        %509 = vmatpush1.bf16.msra.mxu0 0
        %510 = vmatprep.subr.bf16.mxu0 0
        %511 = vmatpush1.bf16.msra.mxu0 0
        %512 = vmatprep.subr.bf16.mxu0 0
        %513 = vmatpush1.bf16.msra.mxu0 0
        %514 = vmatprep.subr.bf16.mxu0 0
        %515 = vmatpush1.bf16.msra.mxu0 0
        %516 = vmatprep.subr.bf16.mxu0 0
        %517 = vmatpush1.bf16.msra.mxu0 0
        %518 = vmatprep.mubr.bf16.mxu0 0
        %519 = vmatmul.mubr.bf16.gmra.mrb[0].mxu0 %v484
        %v520 = vpop.f32.mrb[0].mxu0
        %v521 = vadd.f32 0.0, %v520
        %v522 = vpop.f32.mrb[0].mxu0
        %v523 = vpop.f32.mrb[0].mxu0
        %v524 = vadd.f32 0.0, %v523
        %v525 = vpop.f32.mrb[0].mxu0
        %526 = vdwg.mxu0
        %v527 = vld [vmem:[%s452] sm:$0x1]
        %v529 = vlaneseq
        %v530 = vshrl.u32 %v529, 7
        %v531 = vsub.s32 0, %v530
        %v532 = vrot.slane %v527, %v531
        %v534 = vmul.f32 %v532, %v470
        %v535 = vmul.f32 %v532, %v471
        %v536 = vadd.f32 %v534, %v521
        %v537 = vadd.f32 %v535, %v524
        %v538 = vpack.c.bf16 %v537, %v536
        %v539 = vld [vmem:[%s393] sm:$0xf]
        %v540 = vld [vmem:[%s393 + $0x4] sm:$0xf]
        %v541 = vld [vmem:[%s393 + $0x8] sm:$0xf]
        %v542 = vld [vmem:[%s393 + $0xc] sm:$0xf]
        %v543 = vld [vmem:[%s393 + $0x10] sm:$0xf]
        %v544 = vld [vmem:[%s393 + $0x14] sm:$0xf]
        %v545 = vld [vmem:[%s393 + $0x18] sm:$0xf]
        %v546 = vld [vmem:[%s393 + $0x1c] sm:$0xf]
        %v547 = vld [vmem:[%s393 + $0x20] sm:$0xf]
        %v548 = vld [vmem:[%s393 + $0x24] sm:$0xf]
        %v549 = vld [vmem:[%s393 + $0x28] sm:$0xf]
        %v550 = vld [vmem:[%s393 + $0x2c] sm:$0xf]
        %v551 = vld [vmem:[%s393 + $0x30] sm:$0xf]
        %v552 = vld [vmem:[%s393 + $0x34] sm:$0xf]
        %v553 = vld [vmem:[%s393 + $0x38] sm:$0xf]
        %v554 = vld [vmem:[%s393 + $0x3c] sm:$0xf]
        %v555 = vld [vmem:[%s455] sm:$0x1]
        %v557 = vlaneseq
        %v558 = vshrl.u32 %v557, 7
        %v559 = vsub.s32 0, %v558
        %v560 = vrot.slane %v555, %v559
        %v578 = vunpack.c.l.b16 %v539
        %v579 = vunpack.c.l.b16 %v540
        %v580 = vunpack.c.l.b16 %v541
        %v581 = vunpack.c.l.b16 %v542
        %v582 = vunpack.c.l.b16 %v543
        %v583 = vunpack.c.l.b16 %v544
        %v584 = vunpack.c.l.b16 %v545
        %v585 = vunpack.c.l.b16 %v546
        %v586 = vunpack.c.l.b16 %v547
        %v587 = vunpack.c.l.b16 %v548
        %v588 = vunpack.c.l.b16 %v549
        %v589 = vunpack.c.l.b16 %v550
        %v590 = vunpack.c.l.b16 %v551
        %v591 = vunpack.c.l.b16 %v552
        %v592 = vunpack.c.l.b16 %v553
        %v593 = vunpack.c.l.b16 %v554
        %v594 = vpack.c.b16 %v579, %v578
        %v595 = vpack.c.b16 %v581, %v580
        %v596 = vpack.c.b16 %v583, %v582
        %v597 = vpack.c.b16 %v585, %v584
        %v598 = vpack.c.b16 %v587, %v586
        %v599 = vpack.c.b16 %v589, %v588
        %v600 = vpack.c.b16 %v591, %v590
        %v601 = vpack.c.b16 %v593, %v592
        %610 = vmatprep.subr.bf16.mxu0 0
        %611 = vmatpush1.bf16.msra.mxu0 %v594
        %612 = vmatprep.subr.bf16.mxu0 0
        %613 = vmatpush1.bf16.msra.mxu0 %v595
        %614 = vmatprep.subr.bf16.mxu0 0
        %615 = vmatpush1.bf16.msra.mxu0 %v596
        %616 = vmatprep.subr.bf16.mxu0 0
        %617 = vmatpush1.bf16.msra.mxu0 %v597
        %618 = vmatprep.subr.bf16.mxu0 0
        %619 = vmatpush1.bf16.msra.mxu0 %v598
        %620 = vmatprep.subr.bf16.mxu0 0
        %621 = vmatpush1.bf16.msra.mxu0 %v599
        %622 = vmatprep.subr.bf16.mxu0 0
        %623 = vmatpush1.bf16.msra.mxu0 %v600
        %624 = vmatprep.subr.bf16.mxu0 0
        %625 = vmatpush1.bf16.msra.mxu0 %v601
        %626 = vmatprep.subr.bf16.mxu0 0
        %627 = vmatpush1.bf16.msra.mxu0 0
        %628 = vmatprep.subr.bf16.mxu0 0
        %629 = vmatpush1.bf16.msra.mxu0 0
        %630 = vmatprep.subr.bf16.mxu0 0
        %631 = vmatpush1.bf16.msra.mxu0 0
        %632 = vmatprep.subr.bf16.mxu0 0
        %633 = vmatpush1.bf16.msra.mxu0 0
        %634 = vmatprep.subr.bf16.mxu0 0
        %635 = vmatpush1.bf16.msra.mxu0 0
        %636 = vmatprep.subr.bf16.mxu0 0
        %637 = vmatpush1.bf16.msra.mxu0 0
        %638 = vmatprep.subr.bf16.mxu0 0
        %639 = vmatpush1.bf16.msra.mxu0 0
        %640 = vmatprep.subr.bf16.mxu0 0
        %641 = vmatpush1.bf16.msra.mxu0 0
        %642 = vmatprep.mubr.bf16.mxu0 0
        %643 = vmatmul.mubr.bf16.gmra.mrb[0].mxu0 %v538
        %v644 = vpop.f32.mrb[0].mxu0
        %v645 = vadd.f32 %v560, %v644
        %v646 = vpop.f32.mrb[0].mxu0
        %v647 = vpop.f32.mrb[0].mxu0
        %v648 = vadd.f32 %v560, %v647
        %v649 = vpop.f32.mrb[0].mxu0
        %650 = vdwg.mxu0
        %v651 = vmax.f32 %v645, 0.0
        %v652 = vmax.f32 %v648, 0.0
        %v653 = vpack.c.bf16 %v652, %v651
        %v654 = vld [vmem:[%s402] sm:$0xf]
        %v655 = vld [vmem:[%s402 + $0x4] sm:$0xf]
        %v656 = vld [vmem:[%s402 + $0x8] sm:$0xf]
        %v657 = vld [vmem:[%s402 + $0xc] sm:$0xf]
        %v658 = vld [vmem:[%s402 + $0x10] sm:$0xf]
        %v659 = vld [vmem:[%s402 + $0x14] sm:$0xf]
        %v660 = vld [vmem:[%s402 + $0x18] sm:$0xf]
        %v661 = vld [vmem:[%s402 + $0x1c] sm:$0xf]
        %v662 = vld [vmem:[%s402 + $0x20] sm:$0xf]
        %v663 = vld [vmem:[%s402 + $0x24] sm:$0xf]
        %v664 = vld [vmem:[%s402 + $0x28] sm:$0xf]
        %v665 = vld [vmem:[%s402 + $0x2c] sm:$0xf]
        %v666 = vld [vmem:[%s402 + $0x30] sm:$0xf]
        %v667 = vld [vmem:[%s402 + $0x34] sm:$0xf]
        %v668 = vld [vmem:[%s402 + $0x38] sm:$0xf]
        %v669 = vld [vmem:[%s402 + $0x3c] sm:$0xf]
        %v670 = vld [vmem:[%s458] sm:$0x1]
        %v672 = vlaneseq
        %v673 = vshrl.u32 %v672, 7
        %v674 = vsub.s32 0, %v673
        %v675 = vrot.slane %v670, %v674
        %v693 = vunpack.c.l.b16 %v654
        %v694 = vunpack.c.l.b16 %v655
        %v695 = vunpack.c.l.b16 %v656
        %v696 = vunpack.c.l.b16 %v657
        %v697 = vunpack.c.l.b16 %v658
        %v698 = vunpack.c.l.b16 %v659
        %v699 = vunpack.c.l.b16 %v660
        %v700 = vunpack.c.l.b16 %v661
        %v701 = vunpack.c.l.b16 %v662
        %v702 = vunpack.c.l.b16 %v663
        %v703 = vunpack.c.l.b16 %v664
        %v704 = vunpack.c.l.b16 %v665
        %v705 = vunpack.c.l.b16 %v666
        %v706 = vunpack.c.l.b16 %v667
        %v707 = vunpack.c.l.b16 %v668
        %v708 = vunpack.c.l.b16 %v669
        %v709 = vpack.c.b16 %v694, %v693
        %v710 = vpack.c.b16 %v696, %v695
        %v711 = vpack.c.b16 %v698, %v697
        %v712 = vpack.c.b16 %v700, %v699
        %v713 = vpack.c.b16 %v702, %v701
        %v714 = vpack.c.b16 %v704, %v703
        %v715 = vpack.c.b16 %v706, %v705
        %v716 = vpack.c.b16 %v708, %v707
        %725 = vmatprep.subr.bf16.mxu0 0
        %726 = vmatpush1.bf16.msra.mxu0 %v709
        %727 = vmatprep.subr.bf16.mxu0 0
        %728 = vmatpush1.bf16.msra.mxu0 %v710
        %729 = vmatprep.subr.bf16.mxu0 0
        %730 = vmatpush1.bf16.msra.mxu0 %v711
        %731 = vmatprep.subr.bf16.mxu0 0
        %732 = vmatpush1.bf16.msra.mxu0 %v712
        %733 = vmatprep.subr.bf16.mxu0 0
        %734 = vmatpush1.bf16.msra.mxu0 %v713
        %735 = vmatprep.subr.bf16.mxu0 0
        %736 = vmatpush1.bf16.msra.mxu0 %v714
        %737 = vmatprep.subr.bf16.mxu0 0
        %738 = vmatpush1.bf16.msra.mxu0 %v715
        %739 = vmatprep.subr.bf16.mxu0 0
        %740 = vmatpush1.bf16.msra.mxu0 %v716
        %741 = vmatprep.subr.bf16.mxu0 0
        %742 = vmatpush1.bf16.msra.mxu0 0
        %743 = vmatprep.subr.bf16.mxu0 0
        %744 = vmatpush1.bf16.msra.mxu0 0
        %745 = vmatprep.subr.bf16.mxu0 0
        %746 = vmatpush1.bf16.msra.mxu0 0
        %747 = vmatprep.subr.bf16.mxu0 0
        %748 = vmatpush1.bf16.msra.mxu0 0
        %749 = vmatprep.subr.bf16.mxu0 0
        %750 = vmatpush1.bf16.msra.mxu0 0
        %751 = vmatprep.subr.bf16.mxu0 0
        %752 = vmatpush1.bf16.msra.mxu0 0
        %753 = vmatprep.subr.bf16.mxu0 0
        %754 = vmatpush1.bf16.msra.mxu0 0
        %755 = vmatprep.subr.bf16.mxu0 0
        %756 = vmatpush1.bf16.msra.mxu0 0
        %757 = vmatprep.mubr.bf16.mxu0 0
        %758 = vmatmul.mubr.bf16.gmra.mrb[0].mxu0 %v653
        %v759 = vpop.f32.mrb[0].mxu0
        %v760 = vadd.f32 %v675, %v759
        %v761 = vpop.f32.mrb[0].mxu0
        %v762 = vpop.f32.mrb[0].mxu0
        %v763 = vadd.f32 %v675, %v762
        %v764 = vpop.f32.mrb[0].mxu0
        %765 = vdwg.mxu0
        %v766 = vmax.f32 %v760, 0.0
        %v767 = vmax.f32 %v763, 0.0
        %768 = vst [vmem:[#allocation2] sm:$0xff] %v766
        %769 = vst [vmem:[#allocation2 + $0x8] sm:$0xff] %v767
        %v770 = vld [vmem:[#allocation3] sm:$0xff]
        %v771 = vld [vmem:[#allocation3 + $0x8] sm:$0xff]
        %v772 = vadd.f32 %v770, %v766
        %v773 = vadd.f32 %v771, %v767
        %774 = vst [vmem:[#allocation3] sm:$0xff] %v772
        %775 = vst [vmem:[#allocation3 + $0x8] sm:$0xff] %v773
        %p776 = scmp.eq.s32.totalorder %s23, 2
        // Predicated region
        $region81: #{tpu_custom_call.1} parent=55 // pred_check
          %p777 = pneg %p776
        $region82: #{tpu_custom_call.1} parent=55 // pred_check_branch
          %779 = sbr.rel (%p777) target = $region84
        $region83: #{tpu_custom_call.1} parent=55 // pred_region
          %v780 = vld [vmem:[#allocation3] sm:$0xff]
          %v781 = vld [vmem:[#allocation3 + $0x8] sm:$0xff]
          %v782 = vpack.c.bf16 %v781, %v780
          %v783 = vld [vmem:[#allocation11] sm:$0xf]
          %v784 = vld [vmem:[#allocation11 + $0x4] sm:$0xf]
          %v785 = vld [vmem:[#allocation11 + $0x8] sm:$0xf]
          %v786 = vld [vmem:[#allocation11 + $0xc] sm:$0xf]
          %v787 = vld [vmem:[#allocation11 + $0x10] sm:$0xf]
          %v788 = vld [vmem:[#allocation11 + $0x14] sm:$0xf]
          %v789 = vld [vmem:[#allocation11 + $0x18] sm:$0xf]
          %v790 = vld [vmem:[#allocation11 + $0x1c] sm:$0xf]
          %v791 = vld [vmem:[#allocation11 + $0x20] sm:$0xf]
          %v792 = vld [vmem:[#allocation11 + $0x24] sm:$0xf]
          %v793 = vld [vmem:[#allocation11 + $0x28] sm:$0xf]
          %v794 = vld [vmem:[#allocation11 + $0x2c] sm:$0xf]
          %v795 = vld [vmem:[#allocation11 + $0x30] sm:$0xf]
          %v796 = vld [vmem:[#allocation11 + $0x34] sm:$0xf]
          %v797 = vld [vmem:[#allocation11 + $0x38] sm:$0xf]
          %v798 = vld [vmem:[#allocation11 + $0x3c] sm:$0xf]
          %v799 = vld [vmem:[%s8] sm:$0x1]
          %v801 = vlaneseq
          %v802 = vshrl.u32 %v801, 7
          %v803 = vsub.s32 0, %v802
          %v804 = vrot.slane %v799, %v803
          %v822 = vunpack.c.l.b16 %v783
          %v823 = vunpack.c.l.b16 %v784
          %v824 = vunpack.c.l.b16 %v785
          %v825 = vunpack.c.l.b16 %v786
          %v826 = vunpack.c.l.b16 %v787
          %v827 = vunpack.c.l.b16 %v788
          %v828 = vunpack.c.l.b16 %v789
          %v829 = vunpack.c.l.b16 %v790
          %v830 = vunpack.c.l.b16 %v791
          %v831 = vunpack.c.l.b16 %v792
          %v832 = vunpack.c.l.b16 %v793
          %v833 = vunpack.c.l.b16 %v794
          %v834 = vunpack.c.l.b16 %v795
          %v835 = vunpack.c.l.b16 %v796
          %v836 = vunpack.c.l.b16 %v797
          %v837 = vunpack.c.l.b16 %v798
          %v838 = vpack.c.b16 %v823, %v822
          %v839 = vpack.c.b16 %v825, %v824
          %v840 = vpack.c.b16 %v827, %v826
          %v841 = vpack.c.b16 %v829, %v828
          %v842 = vpack.c.b16 %v831, %v830
          %v843 = vpack.c.b16 %v833, %v832
          %v844 = vpack.c.b16 %v835, %v834
          %v845 = vpack.c.b16 %v837, %v836
          %854 = vmatprep.subr.bf16.mxu0 0
          %855 = vmatpush1.bf16.msra.mxu0 %v838
          %856 = vmatprep.subr.bf16.mxu0 0
          %857 = vmatpush1.bf16.msra.mxu0 %v839
          %858 = vmatprep.subr.bf16.mxu0 0
          %859 = vmatpush1.bf16.msra.mxu0 %v840
          %860 = vmatprep.subr.bf16.mxu0 0
          %861 = vmatpush1.bf16.msra.mxu0 %v841
          %862 = vmatprep.subr.bf16.mxu0 0
          %863 = vmatpush1.bf16.msra.mxu0 %v842
          %864 = vmatprep.subr.bf16.mxu0 0
          %865 = vmatpush1.bf16.msra.mxu0 %v843
          %866 = vmatprep.subr.bf16.mxu0 0
          %867 = vmatpush1.bf16.msra.mxu0 %v844
          %868 = vmatprep.subr.bf16.mxu0 0
          %869 = vmatpush1.bf16.msra.mxu0 %v845
          %870 = vmatprep.subr.bf16.mxu0 0
          %871 = vmatpush1.bf16.msra.mxu0 0
          %872 = vmatprep.subr.bf16.mxu0 0
          %873 = vmatpush1.bf16.msra.mxu0 0
          %874 = vmatprep.subr.bf16.mxu0 0
          %875 = vmatpush1.bf16.msra.mxu0 0
          %876 = vmatprep.subr.bf16.mxu0 0
          %877 = vmatpush1.bf16.msra.mxu0 0
          %878 = vmatprep.subr.bf16.mxu0 0
          %879 = vmatpush1.bf16.msra.mxu0 0
          %880 = vmatprep.subr.bf16.mxu0 0
          %881 = vmatpush1.bf16.msra.mxu0 0
          %882 = vmatprep.subr.bf16.mxu0 0
          %883 = vmatpush1.bf16.msra.mxu0 0
          %884 = vmatprep.subr.bf16.mxu0 0
          %885 = vmatpush1.bf16.msra.mxu0 0
          %886 = vmatprep.mubr.bf16.mxu0 0
          %887 = vmatmul.mubr.bf16.gmra.mrb[0].mxu0 %v782
          %v888 = vpop.f32.mrb[0].mxu0
          %v889 = vadd.f32 %v804, %v888
          %v890 = vpop.f32.mrb[0].mxu0
          %v891 = vpop.f32.mrb[0].mxu0
          %v892 = vadd.f32 %v804, %v891
          %v893 = vpop.f32.mrb[0].mxu0
          %894 = vdwg.mxu0
          %895 = vst [vmem:[#allocation12] sm:$0xff] %v889
          %896 = vst [vmem:[#allocation12 + $0x8] sm:$0xff] %v892
        $region84: #{tpu_custom_call.1} parent=55 // pred_fallthru
          _
        // Predicated region
        $region85: #{tpu_custom_call.1} parent=55 // pred_check
          %p897 = pneg %p250
        $region86: #{tpu_custom_call.1} parent=55 // pred_check_branch
          %899 = sbr.rel (%p897) target = $region88
        $region87: #{tpu_custom_call.1} parent=55 // pred_region
          %s901 = ssub.s32 256, 256
          %902 = vsyncadd [#allocation6], %s901
          %s903 = sshll.u32 [#allocation12], 4
          %s904 = int_to_ptr.vmem [resolvable:$true] %s903
          %909 = dma.vmem_to_hbm [thread:$0]  %s904, 256, %s9, [#allocation6], 128, 128, 8
        $region88: #{tpu_custom_call.1} parent=55 // pred_fallthru
          _
        // Predicated region
        $region89: #{tpu_custom_call.1} parent=55 // pred_check
          %p910 = pneg %p250
        $region90: #{tpu_custom_call.1} parent=55 // pred_check_branch
          %912 = sbr.rel (%p910) target = $region92
        $region91: #{tpu_custom_call.1} parent=55 // pred_region
          %913 = dma.done [#allocation6], 256
        $region92: #{tpu_custom_call.1} parent=55 // pred_fallthru
          _
      $region56: #{tpu_custom_call.1} parent=5 // pred_fallthru
        _
      %p914 = scmp.le.s32.totalorder 2, %s18
      // Predicated region
      $region93: #{tpu_custom_call.1} parent=5 // pred_check
        %p915 = pneg %p914
      $region94: #{tpu_custom_call.1} parent=5 // pred_check_branch
        %917 = sbr.rel (%p915) target = $region96
      $region95: #{tpu_custom_call.1} parent=5 // pred_region
        %s918 = ssub.s32 %s18, 2
      $region96: #{tpu_custom_call.1} parent=5 // pred_fallthru
        _
    $region6: #{tpu_custom_call.1} parent=1 // loop_footer
      %s22 = sadd.s32 1, %s18
    $region7: #{tpu_custom_call.1} parent=1 // loop_footer_branch
      %17 = sbr.rel target = $region3
    $region8: #{tpu_custom_call.1} parent=1 // loop_exit
      _
    %919 = vsyncpa [#allocation5], 1
    %s920 = scalar_lea.sflag [#allocation5], 1
    %921 = vsyncpa %s920, 1
    %922 = vsyncpa [#allocation8], 1
    %923 = vsyncpa [#allocation6], 1
    %s924 = scalar_lea.sflag [#allocation6], 1
    %925 = vsyncpa %s924, 1

</llo_original>
